<compile_context>
chip_gen: v5e
topology: v5e:2x2
jax: 0.10.0
libtpu: 0.0.40
codegen_flags: <defaults>
</compile_context>

<pallas_src>
import math
from functools import partial

import jax
import jax.numpy as jnp
from jax.experimental import pallas as pl
from jax.experimental.pallas import tpu as pltpu


# ---------------------------------------------------------------------------
# VMEM budgeting helpers (review: cap from hardware, include temporaries)
# ---------------------------------------------------------------------------
def _vmem_cap_bytes():
    try:
        return int(pltpu.get_tpu_info().vmem_capacity_bytes)
    except Exception:
        return 64 << 20        # conservative fallback (v7x per-core VMEM)


def _vmem_limit(estimate_bytes, cap):
    return int(min(int(0.9 * cap), max(32 << 20, 2 * int(estimate_bytes))))


def _pick_row_tile(total_rows, bytes_per_row, budget):
    """Largest divisor of total_rows (multiple of 8) whose block fits budget."""
    if total_rows * bytes_per_row <= budget or total_rows < 16:
        return total_rows
    fitting = [t for t in range(8, total_rows, 8)
               if total_rows % t == 0 and t * bytes_per_row <= budget]
    return max(fitting) if fitting else total_rows


def _pick_cout_tile(cout, cg, per_cout_bytes, shared_bytes, budget):
    """Largest divisor of cout (multiple of cg and 8) fitting the VMEM budget."""
    if shared_bytes + cout * per_cout_bytes <= budget:
        return cout
    align = (8 * cg) // math.gcd(8, cg)
    fitting = [t for t in range(align, cout, align)
               if cout % t == 0 and shared_bytes + t * per_cout_bytes <= budget]
    return max(fitting) if fitting else cout


# ---------------------------------------------------------------------------
# Kernel 1: MaxPool2d(ks).  Row r = c*Hp + yp, lane l = ky*W + x.
# ---------------------------------------------------------------------------
def _pool_kernel(x_ref, o_ref, *, w, ks, wp):
    # x_ref: (1, R, ks*W) f32   o_ref: (1, R, Wp) bf16
    # H-direction taps are contiguous lane slices; cast to bf16 early
    # (round-to-nearest is monotone, so max(bf16(x)) == bf16(max(x))).
    ph = x_ref[0, :, pl.ds(0, w)].astype(jnp.bfloat16)
    for ky in range(1, ks):
        ph = jnp.maximum(ph, x_ref[0, :, pl.ds(ky * w, w)].astype(jnp.bfloat16))

    # W-direction max + stride-ks lane compaction: ks exact 0/1 bf16 selection
    # matmuls (each output picks exactly one input element -> exact).
    rows = jax.lax.broadcasted_iota(jnp.int32, (w, wp), 0)
    cols = jax.lax.broadcasted_iota(jnp.int32, (w, wp), 1)
    out = None
    for kx in range(ks):
        sel = (rows == cols * ks + kx).astype(jnp.bfloat16)
        p = jnp.dot(ph, sel, preferred_element_type=jnp.float32)
        out = p if out is None else jnp.maximum(out, p)
    o_ref[0] = out.astype(o_ref.dtype)


# ---------------------------------------------------------------------------
# Kernel 2: Conv2d(3x3, padding=1) + bias + GroupNorm.
# ---------------------------------------------------------------------------
def _conv_gn_kernel(x_ref, w_ref, b_ref, gamma_ref, beta_ref, o_ref,
                    im2col_ref, acc_ref, *, hp, wp, cg, eps):
    # x_ref:      (1, Cin, HW)        bf16 pooled activations
    # w_ref:      (Ct, 9*Cin)         bf16, [co, k*Cin+ci] = W[co, ci, dy+1, dx+1]
    # b/gamma/beta: (Ct, 1)           f32
    # o_ref:      (1, Ct, HW)         f32
    # im2col_ref: (9*Cin, HW)         bf16 scratch (shared across Cout tiles)
    # acc_ref:    (Ct, HW)            f32 scratch
    hw = hp * wp
    cin = x_ref.shape[1]
    ct = acc_ref.shape[0]

    # ---- im2col staging: built once per batch item (cout-tile j == 0) -------
    @pl.when(pl.program_id(1) == 0)
    def _build_im2col():
        xb = x_ref[0]                                          # (Cin, HW) bf16
        lane = jax.lax.broadcasted_iota(jnp.int32, (1, hw), 1)
        yy = lane // wp
        xx = lane % wp
        vmask = {-1: (yy >= 1).astype(jnp.bfloat16),
                 1: (yy < hp - 1).astype(jnp.bfloat16)}
        hmask = {-1: (xx >= 1).astype(jnp.bfloat16),
                 1: (xx < wp - 1).astype(jnp.bfloat16)}
        for dy in (-1, 0, 1):
            for dx in (-1, 0, 1):
                k = (dy + 1) * 3 + (dx + 1)
                off = dy * wp + dx
                t = pltpu.roll(xb, (-off) % hw, axis=1) if off % hw else xb
                if dy != 0 and dx != 0:
                    t = t * (vmask[dy] * hmask[dx])
                elif dy != 0:
                    t = t * vmask[dy]
                elif dx != 0:
                    t = t * hmask[dx]
                im2col_ref[pl.ds(k * cin, cin), :] = t

    # ---- 3x3 conv as ONE deep matmul (K = 9*Cin) + bias, f32 acc in VMEM ----
    acc_ref[...] = (jnp.dot(w_ref[...], im2col_ref[...],
                            preferred_element_type=jnp.float32)
                    + b_ref[...])

    # ---- GroupNorm: per-channel lane reductions -> group broadcast-sum via a
    #      tiny 0/1 matmul -> one streamed normalize + affine write. ----------
    acc = acc_ref[...]
    s1 = jnp.sum(acc, axis=1, keepdims=True)                  # (Ct, 1)
    s2 = jnp.sum(acc * acc, axis=1, keepdims=True)            # (Ct, 1)

    r = jax.lax.broadcasted_iota(jnp.int32, (ct, ct), 0)
    c = jax.lax.broadcasted_iota(jnp.int32, (ct, ct), 1)
    gmat = ((r // cg) == (c // cg)).astype(jnp.float32)        # group bcast-sum
    gs1 = jnp.dot(gmat, s1, preferred_element_type=jnp.float32)
    gs2 = jnp.dot(gmat, s2, preferred_element_type=jnp.float32)

    inv_n = 1.0 / (hw * cg)
    mean = gs1 * inv_n
    var = jnp.maximum(gs2 * inv_n - mean * mean, 0.0)          # clamp >= 0
    inv_std = jax.lax.rsqrt(var + eps)
    scale = gamma_ref[...] * inv_std                           # (Ct, 1)
    shift = beta_ref[...] - mean * scale                       # (Ct, 1)
    o_ref[0] = (acc_ref[...] * scale + shift).astype(o_ref.dtype)


# ---------------------------------------------------------------------------
# Wrapper
# ---------------------------------------------------------------------------
def downsample(x, conv_w, conv_b, gn_w, gn_b, *, ks, groups, eps=1e-5):
    """x: (N, Cin, H, W) f32 NCHW. Returns (N, Cout, H//ks, W//ks) f32."""
    n, cin, h, w = x.shape
    cout = conv_w.shape[0]
    assert h % ks == 0 and w % ks == 0, "spatial dims must be divisible by ks"
    assert cout % groups == 0
    hp, wp = h // ks, w // ks
    hw = hp * wp
    cg = cout // groups

    cap = _vmem_cap_bytes()

    # ---- pass 1: MaxPool2d(ks)  (only a FREE reshape on the host) ----------
    x2 = x.reshape(n, cin * hp, ks * w)
    total_rows = cin * hp
    bytes_per_row = 2 * ks * w * 4 + w * 2 + 2 * wp * 2 + 2 * wp * 4
    row_tile = _pick_row_tile(total_rows, bytes_per_row, budget=int(0.35 * cap))
    pool_est = row_tile * bytes_per_row + ks * w * wp * 2 + (1 << 20)

    pooled = pl.pallas_call(
        partial(_pool_kernel, w=w, ks=ks, wp=wp),
        out_shape=jax.ShapeDtypeStruct((n, total_rows, wp), jnp.bfloat16),
        grid_spec=pltpu.PrefetchScalarGridSpec(
            num_scalar_prefetch=0,
            grid=(n, total_rows // row_tile),
            in_specs=[pl.BlockSpec((1, row_tile, ks * w), lambda i, r: (i, r, 0))],
            out_specs=pl.BlockSpec((1, row_tile, wp), lambda i, r: (i, r, 0)),
        ),
        compiler_params=pltpu.CompilerParams(
            dimension_semantics=("parallel", "parallel"),
            vmem_limit_bytes=_vmem_limit(pool_est, cap),
        ),
    )(x2)

    # (N, Cin*Hp, Wp) and (N, Cin, Hp*Wp) are the same bytes -> free view that
    # presents channels-on-sublanes / flat-spatial-on-lanes to the conv.
    pooled = pooled.reshape(n, cin, hw)

    # ---- pass 2: Conv2d(3x3, pad=1) + bias + GroupNorm ----------------------
    # w2[co, k*Cin+ci] = W[co, ci, dy+1, dx+1] with k = (dy+1)*3 + (dx+1).
    w2 = jnp.transpose(conv_w, (0, 2, 3, 1)).reshape(cout, 9 * cin)
    w2 = w2.astype(jnp.bfloat16)
    b2 = conv_b.reshape(cout, 1).astype(jnp.float32)
    g2 = gn_w.reshape(cout, 1).astype(jnp.float32)
    bt2 = gn_b.reshape(cout, 1).astype(jnp.float32)

    shared = 2 * (cin * hw * 2) + 9 * cin * hw * 2 + cin * hw * 2 + (2 << 20)
    per_cout = 2 * (9 * cin * 2) + 2 * (hw * 4) + hw * 4 + hw * 4
    cout_tile = _pick_cout_tile(cout, cg, per_cout, shared, budget=int(0.45 * cap))
    conv_est = shared + cout_tile * per_cout

    out_flat = pl.pallas_call(
        partial(_conv_gn_kernel, hp=hp, wp=wp, cg=cg, eps=eps),
        out_shape=jax.ShapeDtypeStruct((n, cout, hw), jnp.float32),
        grid_spec=pltpu.PrefetchScalarGridSpec(
            num_scalar_prefetch=0,
            grid=(n, cout // cout_tile),
            in_specs=[
                pl.BlockSpec((1, cin, hw), lambda i, j: (i, 0, 0)),
                pl.BlockSpec((cout_tile, 9 * cin), lambda i, j: (j, 0)),
                pl.BlockSpec((cout_tile, 1), lambda i, j: (j, 0)),
                pl.BlockSpec((cout_tile, 1), lambda i, j: (j, 0)),
                pl.BlockSpec((cout_tile, 1), lambda i, j: (j, 0)),
            ],
            out_specs=pl.BlockSpec((1, cout_tile, hw), lambda i, j: (i, j, 0)),
            scratch_shapes=[
                pltpu.VMEM((9 * cin, hw), jnp.bfloat16),    # im2col staging
                pltpu.VMEM((cout_tile, hw), jnp.float32),   # conv accumulator
            ],
        ),
        compiler_params=pltpu.CompilerParams(
            # Cout-tile axis is "arbitrary": im2col is built at j == 0 and
            # reused (sequentially, same core) by the remaining cout tiles.
            dimension_semantics=("parallel", "arbitrary"),
            vmem_limit_bytes=_vmem_limit(conv_est, cap),
        ),
    )(pooled, w2, b2, g2, bt2)

    return out_flat.reshape(n, cout, hp, wp)                   # NCHW


# ---------------------------------------------------------------------------
# Pure-JAX reference (matches the PyTorch module, f32 throughout)
# ---------------------------------------------------------------------------
def reference(x, conv_w, conv_b, gn_w, gn_b, *, ks, groups, eps=1e-5):
    xp = jax.lax.reduce_window(x, -jnp.inf, jax.lax.max,
                               (1, 1, ks, ks), (1, 1, ks, ks), 'VALID')
    y = jax.lax.conv_general_dilated(
        xp, conv_w, window_strides=(1, 1), padding=((1, 1), (1, 1)),
        dimension_numbers=('NCHW', 'OIHW', 'NCHW'))
    y = y + conv_b[None, :, None, None]
    n, c, hh, ww = y.shape
    yg = y.reshape(n, groups, c // groups, hh, ww)
    mean = jnp.mean(yg, axis=(2, 3, 4), keepdims=True)
    var = jnp.var(yg, axis=(2, 3, 4), keepdims=True)
    yn = ((yg - mean) / jnp.sqrt(var + eps)).reshape(n, c, hh, ww)
    return yn * gn_w[None, :, None, None] + gn_b[None, :, None, None]


if __name__ == "__main__":
    N, DIM, DIM_OUT, KS, H, W = 2, 4, 8, 2, 32, 32
    GROUPS = max(1, DIM_OUT // 4)

    key = jax.random.PRNGKey(0)
    kx, kw, kb, kg, kbt = jax.random.split(key, 5)

    x = jax.random.normal(kx, (N, DIM, H, W), jnp.float32)
    fan_in = DIM * 3 * 3
    bound = 1.0 / math.sqrt(fan_in)
    conv_w = jax.random.uniform(kw, (DIM_OUT, DIM, 3, 3), jnp.float32,
                                -bound, bound)
    conv_b = jax.random.uniform(kb, (DIM_OUT,), jnp.float32, -bound, bound)
    gn_w = 1.0 + 0.1 * jax.random.normal(kg, (DIM_OUT,), jnp.float32)
    gn_b = 0.1 * jax.random.normal(kbt, (DIM_OUT,), jnp.float32)

    out = downsample(x, conv_w, conv_b, gn_w, gn_b, ks=KS, groups=GROUPS)
    out = jax.block_until_ready(out)

    ref = reference(x, conv_w, conv_b, gn_w, gn_b, ks=KS, groups=GROUPS)
    assert out.shape == (N, DIM_OUT, H // KS, W // KS), out.shape
    max_err = float(jnp.max(jnp.abs(out - ref)))
    # bf16 MXU inputs (f32 accumulation) -> ~1e-2-level deviation from f32 ref.
    assert bool(jnp.allclose(out, ref, rtol=5e-2, atol=5e-2)), f"max_err={max_err}"

    print("KERNEL_OK")
</pallas_src>

<mosaic_0001>
module attributes {stable_mosaic.version = 11 : i64} {
  func.func @_pool_kernel(%arg0: i32, %arg1: i32, %arg2: memref<1x64x64xf32, #tpu.memory_space<vmem>>, %arg3: memref<1x64x16xbf16, #tpu.memory_space<vmem>>) attributes {dimension_semantics = [#tpu.dimension_semantics<parallel>, #tpu.dimension_semantics<parallel>], iteration_bounds = array<i64: 2, 1>, scalar_prefetch = 0 : i64, scratch_operands = 0 : i64, tpu.core_type = #tpu.core_type<tc>, window_params = [{transform_indices = @transform_0, window_bounds = array<i64: 1, 64, 64>}, {transform_indices = @transform_1, window_bounds = array<i64: 1, 64, 16>}]} {
    %c0 = arith.constant 0 : index
    %c0_0 = arith.constant 0 : index
    %c0_1 = arith.constant 0 : index
    %0 = vector.load %arg2[%c0, %c0_0, %c0_1] : memref<1x64x64xf32, #tpu.memory_space<vmem>>, vector<1x64x32xf32>
    %1 = vector.shape_cast %0 : vector<1x64x32xf32> to vector<64x32xf32>
    %2 = arith.truncf %1 : vector<64x32xf32> to vector<64x32xbf16>
    %c0_2 = arith.constant 0 : index
    %c0_3 = arith.constant 0 : index
    %c32 = arith.constant 32 : index
    %3 = vector.load %arg2[%c0_2, %c0_3, %c32] : memref<1x64x64xf32, #tpu.memory_space<vmem>>, vector<1x64x32xf32>
    %4 = vector.shape_cast %3 : vector<1x64x32xf32> to vector<64x32xf32>
    %5 = arith.truncf %4 : vector<64x32xf32> to vector<64x32xbf16>
    %6 = arith.maximumf %2, %5 : vector<64x32xbf16>
    %7 = tpu.iota {dimensions = array<i32: 0>} : vector<32x16xi32>
    %8 = tpu.iota {dimensions = array<i32: 1>} : vector<32x16xi32>
    %c2_i32 = arith.constant 2 : i32
    %9 = vector.broadcast %c2_i32 : i32 to vector<32x16xi32>
    %10 = arith.muli %8, %9 : vector<32x16xi32>
    %c0_i32 = arith.constant 0 : i32
    %11 = vector.broadcast %c0_i32 : i32 to vector<32x16xi32>
    %12 = arith.addi %10, %11 : vector<32x16xi32>
    %13 = arith.cmpi eq, %7, %12 : vector<32x16xi32>
    %14 = arith.extui %13 : vector<32x16xi1> to vector<32x16xi32>
    %15 = arith.sitofp %14 : vector<32x16xi32> to vector<32x16xf32>
    %16 = arith.truncf %15 : vector<32x16xf32> to vector<32x16xbf16>
    %cst = arith.constant dense<0.000000e+00> : vector<64x16xf32>
    %17 = tpu.matmul %6, %16, %cst {dimension_numbers = #tpu.dot_dimension_numbers<[1], [0], [0], [1], [0, 0, 1, 1], [], []>} : vector<64x32xbf16>, vector<32x16xbf16>, vector<64x16xf32> -> vector<64x16xf32>
    %c2_i32_4 = arith.constant 2 : i32
    %18 = vector.broadcast %c2_i32_4 : i32 to vector<32x16xi32>
    %19 = arith.muli %8, %18 : vector<32x16xi32>
    %c1_i32 = arith.constant 1 : i32
    %20 = vector.broadcast %c1_i32 : i32 to vector<32x16xi32>
    %21 = arith.addi %19, %20 : vector<32x16xi32>
    %22 = arith.cmpi eq, %7, %21 : vector<32x16xi32>
    %23 = arith.extui %22 : vector<32x16xi1> to vector<32x16xi32>
    %24 = arith.sitofp %23 : vector<32x16xi32> to vector<32x16xf32>
    %25 = arith.truncf %24 : vector<32x16xf32> to vector<32x16xbf16>
    %cst_5 = arith.constant dense<0.000000e+00> : vector<64x16xf32>
    %26 = tpu.matmul %6, %25, %cst_5 {dimension_numbers = #tpu.dot_dimension_numbers<[1], [0], [0], [1], [0, 0, 1, 1], [], []>} : vector<64x32xbf16>, vector<32x16xbf16>, vector<64x16xf32> -> vector<64x16xf32>
    %27 = arith.maximumf %17, %26 : vector<64x16xf32>
    %28 = arith.truncf %27 : vector<64x16xf32> to vector<64x16xbf16>
    %c0_6 = arith.constant 0 : index
    %c0_7 = arith.constant 0 : index
    %c0_8 = arith.constant 0 : index
    %29 = vector.load %arg3[%c0_6, %c0_7, %c0_8] : memref<1x64x16xbf16, #tpu.memory_space<vmem>>, vector<1x64x16xbf16>
    %30 = vector.shape_cast %29 : vector<1x64x16xbf16> to vector<64x16xbf16>
    %31 = vector.shape_cast %28 : vector<64x16xbf16> to vector<1x64x16xbf16>
    tpu.vector_store %arg3[%c0_6, %c0_7, %c0_8], %31 {strides = array<i32>} : memref<1x64x16xbf16, #tpu.memory_space<vmem>>, vector<1x64x16xbf16>,
    return
  }
  func.func @transform_0(%arg0: i32, %arg1: i32) -> (i32, i32, i32) {
    %c0_i32 = arith.constant 0 : i32
    %c0_i32_0 = arith.constant 0 : i32
    return %arg0, %arg1, %c0_i32 : i32, i32, i32
  }
  func.func @transform_1(%arg0: i32, %arg1: i32) -> (i32, i32, i32) {
    %c0_i32 = arith.constant 0 : i32
    %c0_i32_0 = arith.constant 0 : i32
    return %arg0, %arg1, %c0_i32 : i32, i32, i32
  }
}

</mosaic_0001>

<llo_original>
// kernel: tpu_custom_call.1
$region0: #{tpu_custom_call.1}
  #allocation0 [shape = 'u32[]', space=smem, size = 0x4, offset = 0x4, fixed_abs, tag = 'smem constant byte address 0x4 - core index']
  #allocation1 [shape = 'u32[72,128]{1,0:T(1,128)}', space=vmem, size = 0x9000, scoped, tag = 'internal scratch']
  %s0 = inlined_call_operand.hbm [shape: f32[2,64,64], index: 0, kind: input, shape index: {}]
  %s1 = inlined_call_operand.vmem [shape: bf16[2,64,16], index: 1, kind: output, shape index: {}]
  %s2 = sld [smem:[#allocation0]]
  $region41: #{tpu_custom_call.1} parent=0
    _
  %s4 = ssub.s32 1, %s2
  %s5 = scalar_select 0, %s4, %s2
  $region1: #{tpu_custom_call.1} parent=0
    #allocation2 [shape = 'u8[65536]{0}', space=vmem, size = 0x10000, scoped, tag = 'input window, operand 0']
    #allocation3 [shape = 's32[2]{0}', space=sflag, size = 0x8, scoped, tag = 'scoped memory for tpu_custom_call.1']
    %6 = vsyncpa [#allocation3], 0
    %s7 = scalar_lea.sflag [#allocation3], 1
    %8 = vsyncpa %s7, 0
    loop: start=0, step=1, limit=4
    $region2: #{tpu_custom_call.1} parent=1 // loop_pre_header
      _
    $region3: #{tpu_custom_call.1} parent=1 // loop_header
      %s10 = sphi 0, %s14
      %p11 = scmp.ge.s32.totalorder %s10, 4
      %s17 = sphi 0, %s29
      %s18 = sphi 0, %s25
      %s19 = sphi 0, %s17
      %s20 = sphi 0, %s18
      %s21 = sphi 0, %s19
      %s22 = sphi 0, %s20
      %s34 = sphi 0, %s36
      %s37 = sphi 0, %s34
      %s38 = sphi 0, %s37
      %s54 = sphi 0, %s38
      %s62 = sphi 0, %s64
      %s65 = sphi 0, %s62
      %s66 = sphi 0, %s65
      %s82 = sphi 0, %s66
    $region4: #{tpu_custom_call.1} parent=1 // loop_header_branch
      %13 = sbr.rel (%p11) target = $region8
    $region5: #{tpu_custom_call.1} parent=1 // loop_body
      %s15 = ssub.s32 %s10, 1
      %s16 = ssub.s32 %s10, 2
      %s23 = sadd.s32 1, %s18
      %p24 = scmp.ge.s32.totalorder %s23, 1
      %s25 = scalar_select %p24, 0, %s23
      %s26 = sadd.s32 1, %s17
      %s27 = scalar_select %p24, %s26, %s17
      %p28 = scmp.ge.s32.totalorder %s27, 2
      %s29 = scalar_select %p28, 0, %s27
      %s30 = ssub.s32 %s17, %s29
      %s31 = ssub.s32 %s18, %s25
      %s32 = sor.u32 %s30, %s31
      %p33 = scmp.eq.s32.totalorder %s32, 0
      %s35 = sadd.s32 %s34, 1
      %s36 = scalar_select %p33, %s34, %s35
      %p39 = pneg %p33
      %p40 = scmp.eq.s32.totalorder %s10, 1
      %p41 = por %p39, %p40
      %p42 = scmp.ne.s32.totalorder %s34, %s37
      %p43 = scmp.eq.s32.totalorder %s10, 0
      %p44 = por %p42, %p43
      %p45 = scmp.ne.s32.totalorder %s34, %s37
      %p46 = scmp.eq.s32.totalorder %s15, 1
      %p47 = por %p45, %p46
      %p48 = scmp.ne.s32.totalorder %s37, %s38
      %p49 = scmp.eq.s32.totalorder %s15, 0
      %p50 = por %p48, %p49
      %p51 = scmp.ne.s32.totalorder %s37, %s38
      %p52 = scmp.eq.s32.totalorder %s16, 1
      %p53 = por %p51, %p52
      %p55 = scmp.ne.s32.totalorder %s38, %s54
      %p56 = scmp.eq.s32.totalorder %s16, 0
      %p57 = por %p55, %p56
      %s58 = ssub.s32 %s17, %s29
      %s59 = ssub.s32 %s18, %s25
      %s60 = sor.u32 %s58, %s59
      %p61 = scmp.eq.s32.totalorder %s60, 0
      %s63 = sadd.s32 %s62, 1
      %s64 = scalar_select %p61, %s62, %s63
      %p67 = pneg %p61
      %p68 = scmp.eq.s32.totalorder %s10, 1
      %p69 = por %p67, %p68
      %p70 = scmp.ne.s32.totalorder %s62, %s65
      %p71 = scmp.eq.s32.totalorder %s10, 0
      %p72 = por %p70, %p71
      %p73 = scmp.ne.s32.totalorder %s62, %s65
      %p74 = scmp.eq.s32.totalorder %s15, 1
      %p75 = por %p73, %p74
      %p76 = scmp.ne.s32.totalorder %s65, %s66
      %p77 = scmp.eq.s32.totalorder %s15, 0
      %p78 = por %p76, %p77
      %p79 = scmp.ne.s32.totalorder %s65, %s66
      %p80 = scmp.eq.s32.totalorder %s16, 1
      %p81 = por %p79, %p80
      %p83 = scmp.ne.s32.totalorder %s66, %s82
      %p84 = scmp.eq.s32.totalorder %s16, 0
      %p85 = por %p83, %p84
      %p86 = scmp.le.s32.totalorder 1, %s10
      %p87 = scmp.lt.s32.totalorder %s10, 3
      %p88 = pnand %p86, %p87
      %p89 = pneg %p88
      // Predicated region
      $region9: #{tpu_custom_call.1} parent=5 // pred_check
        _
      $region10: #{tpu_custom_call.1} parent=5 // pred_check_branch
        %91 = sbr.rel (%p88) target = $region12
      $region11: #{tpu_custom_call.1} parent=5 // pred_region
        %s92 = ssub.s32 %s10, 1
      $region12: #{tpu_custom_call.1} parent=5 // pred_fallthru
        _
      %p93 = scmp.lt.s32.totalorder %s10, 2
      // Predicated region
      $region13: #{tpu_custom_call.1} parent=5 // pred_check
        %p94 = pneg %p93
      $region14: #{tpu_custom_call.1} parent=5 // pred_check_branch
        %96 = sbr.rel (%p94) target = $region16
      $region15: #{tpu_custom_call.1} parent=5 // pred_region
        // Predicated region
        $region17: #{tpu_custom_call.1} parent=15 // pred_check
          %p97 = pneg %p44
        $region18: #{tpu_custom_call.1} parent=15 // pred_check_branch
          %99 = sbr.rel (%p97) target = $region20
        $region19: #{tpu_custom_call.1} parent=15 // pred_region
          %s100 = sand.u32 %s34, 1
          %s101 = scalar_lea.sflag [#allocation3], %s100
          %s102 = sand.u32 %s34, 1
          %s103 = smul.addr %s102, 64
          %s104 = scalar_lea.vmem [#allocation2], %s103
          %s105 = smul.u32 8, %s18
          %107 = vsyncadd %s101, 0
          %s108 = smul.addr %s17, 8
          %s109 = sadd.s32 %s105, %s108
          %s110 = smul.addr %s109, 8
          %s111 = scalar_lea.hbm %s0, %s110
          %s112 = sshll.u32 %s111, 4
          %s113 = int_to_ptr.hbm [resolvable:$true] %s112
          %s114 = sshll.u32 %s104, 4
          %s115 = int_to_ptr.vmem [resolvable:$true] %s114
          %120 = dma.hbm_to_vmem [thread:$0]  %s113, 1024, %s115, %s101, 128, 128, 8
        $region20: #{tpu_custom_call.1} parent=15 // pred_fallthru
          _
      $region16: #{tpu_custom_call.1} parent=5 // pred_fallthru
        _
      %p121 = scmp.le.s32.totalorder 1, %s10
      %p122 = scmp.lt.s32.totalorder %s10, 3
      %p123 = pnand %p121, %p122
      %p124 = pneg %p123
      // Predicated region
      $region21: #{tpu_custom_call.1} parent=5 // pred_check
        _
      $region22: #{tpu_custom_call.1} parent=5 // pred_check_branch
        %126 = sbr.rel (%p123) target = $region24
      $region23: #{tpu_custom_call.1} parent=5 // pred_region
        %s127 = ssub.s32 %s10, 1
        %s128 = sand.u32 %s37, 1
        %s129 = scalar_lea.sflag [#allocation3], %s128
        %s130 = sand.u32 %s37, 1
        %s131 = smul.addr %s130, 64
        %s132 = scalar_lea.vmem [#allocation2], %s131
        // Predicated region
        $region25: #{tpu_custom_call.1} parent=23 // pred_check
          %p133 = pneg %p50
        $region26: #{tpu_custom_call.1} parent=23 // pred_check_branch
          %135 = sbr.rel (%p133) target = $region28
        $region27: #{tpu_custom_call.1} parent=23 // pred_region
          %137 = dma.done %s129, 1024
        $region28: #{tpu_custom_call.1} parent=23 // pred_fallthru
          _
        %s138 = sand.u32 %s37, 1
        %s139 = scalar_lea.sflag [#allocation3], %s138
        %s140 = sand.u32 %s37, 1
        %s141 = smul.addr %s140, 64
        %s142 = scalar_lea.vmem [#allocation2], %s141
        %p143 = pneg %p50
        %p144 = pneg %p47
        %p145 = pneg %p78
        %p146 = pneg %p75
        %s147 = smul.u32 8, %s20
        %p148 = scmp.lt.s32.totalorder %s19, 1
        %s149 = scalar_select %p148, %s19, 1
        %p150 = scmp.lt.s32.totalorder %s147, 7
        %s151 = scalar_select %p150, %s147, 7
        %s152 = smul.addr %s149, 8
        %s153 = sadd.s32 %s151, %s152
        %s154 = smul.addr %s153, 4
        %s155 = scalar_lea.vmem %s1, %s154
        %s156 = smul.u32 8, %s20
        %s157 = smul.u32 8, %s20
        %p158 = scmp.lt.s32.totalorder %s19, 1
        %s159 = scalar_select %p158, %s19, 1
        %p160 = scmp.lt.s32.totalorder %s157, 7
        %s161 = scalar_select %p160, %s157, 7
        %s162 = smul.addr %s159, 8
        %s163 = sadd.s32 %s161, %s162
        %s164 = smul.addr %s163, 4
        %s165 = scalar_lea.vmem %s1, %s164
        %s166 = smul.u32 8, %s20
        %v168 = vld [vmem:[%s132] sm:$0xff]
        %v169 = vld [vmem:[%s132 + $0x8] sm:$0xff]
        %v170 = vld [vmem:[%s132 + $0x10] sm:$0xff]
        %v171 = vld [vmem:[%s132 + $0x18] sm:$0xff]
        %v172 = vld [vmem:[%s132 + $0x20] sm:$0xff]
        %v173 = vld [vmem:[%s132 + $0x28] sm:$0xff]
        %v174 = vld [vmem:[%s132 + $0x30] sm:$0xff]
        %v175 = vld [vmem:[%s132 + $0x38] sm:$0xff]
        %v176 = vpack.c.bf16 %v168, %v168
        %v177 = vpack.c.bf16 %v169, %v169
        %v178 = vpack.c.bf16 %v170, %v170
        %v179 = vpack.c.bf16 %v171, %v171
        %v180 = vpack.c.bf16 %v172, %v172
        %v181 = vpack.c.bf16 %v173, %v173
        %v182 = vpack.c.bf16 %v174, %v174
        %v183 = vpack.c.bf16 %v175, %v175
        %v184 = vunpack.c.l.bf16 %v176
        %v185 = vunpack.c.l.bf16 %v177
        %v186 = vunpack.c.l.bf16 %v178
        %v187 = vunpack.c.l.bf16 %v179
        %v188 = vunpack.c.l.bf16 %v180
        %v189 = vunpack.c.l.bf16 %v181
        %v190 = vunpack.c.l.bf16 %v182
        %v191 = vunpack.c.l.bf16 %v183
        %200 = vrot.lane.b32.xlu0 %v184, 96
        %v201 = vpop.permute.xlu0 %200
        %202 = vrot.lane.b32.xlu0 %v185, 96
        %v203 = vpop.permute.xlu0 %202
        %204 = vrot.lane.b32.xlu0 %v186, 96
        %v205 = vpop.permute.xlu0 %204
        %206 = vrot.lane.b32.xlu0 %v187, 96
        %v207 = vpop.permute.xlu0 %206
        %208 = vrot.lane.b32.xlu0 %v188, 96
        %v209 = vpop.permute.xlu0 %208
        %210 = vrot.lane.b32.xlu0 %v189, 96
        %v211 = vpop.permute.xlu0 %210
        %212 = vrot.lane.b32.xlu0 %v190, 96
        %v213 = vpop.permute.xlu0 %212
        %214 = vrot.lane.b32.xlu0 %v191, 96
        %v215 = vpop.permute.xlu0 %214
        %v224 = vmax.f32 %v184, %v201
        %v225 = vmax.f32 %v185, %v203
        %v226 = vmax.f32 %v186, %v205
        %v227 = vmax.f32 %v187, %v207
        %v228 = vmax.f32 %v188, %v209
        %v229 = vmax.f32 %v189, %v211
        %v230 = vmax.f32 %v190, %v213
        %v231 = vmax.f32 %v191, %v215
        %v232 = vpack.c.bf16 %v225, %v224
        %v233 = vpack.c.bf16 %v227, %v226
        %v234 = vpack.c.bf16 %v229, %v228
        %v235 = vpack.c.bf16 %v231, %v230
        %v236 = vlaneseq
        %v237 = vshrl.u32 %v236, 7
        %v238 = vadd.s32 %v237, 8
        %v239 = vadd.s32 %v237, 16
        %v240 = vadd.s32 %v237, 24
        %v241 = vlaneseq
        %v242 = vand.u32 %v241, 127
        %v243 = vmul.u32 %v242, 2
        %vm244 = vcmp.eq.s32.totalorder %v237, %v243
        %vm245 = vcmp.eq.s32.totalorder %v238, %v243
        %vm246 = vcmp.eq.s32.totalorder %v239, %v243
        %vm247 = vcmp.eq.s32.totalorder %v240, %v243
        %v248 = vsel %vm244, 1, 0
        %v249 = vsel %vm245, 1, 0
        %v250 = vsel %vm246, 1, 0
        %v251 = vsel %vm247, 1, 0
        %v252 = vcvt.s32.f32 %v248
        %v253 = vcvt.s32.f32 %v249
        %v254 = vcvt.s32.f32 %v250
        %v255 = vcvt.s32.f32 %v251
        %v256 = vpack.c.bf16 %v253, %v252
        %v257 = vpack.c.bf16 %v255, %v254
        %vm258 = vcmask 261120
        %v260 = vsel %vm258, %v232, 0
        %v263 = vsel %vm258, %v233, 0
        %v266 = vsel %vm258, %v234, 0
        %v269 = vsel %vm258, %v235, 0
        %271 = vmatpush.bf16.msra.mxu0 0
        %272 = vmatpush.bf16.msra.mxu0 0
        %273 = vmatpush.bf16.msra.mxu0 0
        %274 = vmatpush.bf16.msra.mxu0 0
        %275 = vmatpush.bf16.msra.mxu0 0
        %276 = vmatpush.bf16.msra.mxu0 0
        %277 = vmatpush.bf16.msra.mxu0 %v257
        %278 = vmatpush.bf16.msra.mxu0 %v256
        %279 = vmatmul.bf16.gmra.mxu0 %v260
        %v280 = vpop.f32.mrf.mxu0
        %v281 = vadd.f32 0.0, %v280
        %v282 = vpop.f32.mrf.mxu0
        %v283 = vadd.f32 0.0, %v282
        %284 = vmatmul.bf16.gmra.mxu0 %v263
        %v285 = vpop.f32.mrf.mxu0
        %v286 = vadd.f32 0.0, %v285
        %v287 = vpop.f32.mrf.mxu0
        %v288 = vadd.f32 0.0, %v287
        %289 = vmatmul.bf16.gmra.mxu0 %v266
        %v290 = vpop.f32.mrf.mxu0
        %v291 = vadd.f32 0.0, %v290
        %v292 = vpop.f32.mrf.mxu0
        %v293 = vadd.f32 0.0, %v292
        %294 = vmatmul.bf16.gmra.mxu0 %v269
        %v295 = vpop.f32.mrf.mxu0
        %v296 = vadd.f32 0.0, %v295
        %v297 = vpop.f32.mrf.mxu0
        %v298 = vadd.f32 0.0, %v297
        %299 = vdwg.mxu0
        %v300 = vadd.s32 %v243, 1
        %vm301 = vcmp.eq.s32.totalorder %v237, %v300
        %vm302 = vcmp.eq.s32.totalorder %v238, %v300
        %vm303 = vcmp.eq.s32.totalorder %v239, %v300
        %vm304 = vcmp.eq.s32.totalorder %v240, %v300
        %v305 = vsel %vm301, 1, 0
        %v306 = vsel %vm302, 1, 0
        %v307 = vsel %vm303, 1, 0
        %v308 = vsel %vm304, 1, 0
        %v309 = vcvt.s32.f32 %v305
        %v310 = vcvt.s32.f32 %v306
        %v311 = vcvt.s32.f32 %v307
        %v312 = vcvt.s32.f32 %v308
        %v313 = vpack.c.bf16 %v310, %v309
        %v314 = vpack.c.bf16 %v312, %v311
        %315 = vmatpush.bf16.msra.mxu0 0
        %316 = vmatpush.bf16.msra.mxu0 0
        %317 = vmatpush.bf16.msra.mxu0 0
        %318 = vmatpush.bf16.msra.mxu0 0
        %319 = vmatpush.bf16.msra.mxu0 0
        %320 = vmatpush.bf16.msra.mxu0 0
        %321 = vmatpush.bf16.msra.mxu0 %v314
        %322 = vmatpush.bf16.msra.mxu0 %v313
        %323 = vmatmul.bf16.gmra.mxu0 %v260
        %v324 = vpop.f32.mrf.mxu0
        %v325 = vadd.f32 0.0, %v324
        %v326 = vpop.f32.mrf.mxu0
        %v327 = vadd.f32 0.0, %v326
        %328 = vmatmul.bf16.gmra.mxu0 %v263
        %v329 = vpop.f32.mrf.mxu0
        %v330 = vadd.f32 0.0, %v329
        %v331 = vpop.f32.mrf.mxu0
        %v332 = vadd.f32 0.0, %v331
        %333 = vmatmul.bf16.gmra.mxu0 %v266
        %v334 = vpop.f32.mrf.mxu0
        %v335 = vadd.f32 0.0, %v334
        %v336 = vpop.f32.mrf.mxu0
        %v337 = vadd.f32 0.0, %v336
        %338 = vmatmul.bf16.gmra.mxu0 %v269
        %v339 = vpop.f32.mrf.mxu0
        %v340 = vadd.f32 0.0, %v339
        %v341 = vpop.f32.mrf.mxu0
        %v342 = vadd.f32 0.0, %v341
        %343 = vdwg.mxu0
        %v344 = vmax.f32 %v281, %v325
        %v345 = vmax.f32 %v283, %v327
        %v346 = vmax.f32 %v286, %v330
        %v347 = vmax.f32 %v288, %v332
        %v348 = vmax.f32 %v291, %v335
        %v349 = vmax.f32 %v293, %v337
        %v350 = vmax.f32 %v296, %v340
        %v351 = vmax.f32 %v298, %v342
        %v352 = vpack.c.bf16 %v344, %v344
        %v353 = vpack.c.bf16 %v345, %v345
        %v354 = vpack.c.bf16 %v346, %v346
        %v355 = vpack.c.bf16 %v347, %v347
        %v356 = vpack.c.bf16 %v348, %v348
        %v357 = vpack.c.bf16 %v349, %v349
        %v358 = vpack.c.bf16 %v350, %v350
        %v359 = vpack.c.bf16 %v351, %v351
        %vm360 = vcmask 125952
        %361 = vst.msk [vmem:[%s165] sm:$0xf] %vm360, %v352
        %362 = vst.msk [vmem:[%s165 + $0x4] sm:$0xf] %vm360, %v353
        %363 = vst.msk [vmem:[%s165 + $0x8] sm:$0xf] %vm360, %v354
        %364 = vst.msk [vmem:[%s165 + $0xc] sm:$0xf] %vm360, %v355
        %365 = vst.msk [vmem:[%s165 + $0x10] sm:$0xf] %vm360, %v356
        %366 = vst.msk [vmem:[%s165 + $0x14] sm:$0xf] %vm360, %v357
        %367 = vst.msk [vmem:[%s165 + $0x18] sm:$0xf] %vm360, %v358
        %368 = vst.msk [vmem:[%s165 + $0x1c] sm:$0xf] %vm360, %v359
        %s369 = smul.u32 8, %s20
        %p370 = scmp.lt.s32.totalorder %s19, 1
        %s371 = scalar_select %p370, %s19, 1
        %p372 = scmp.lt.s32.totalorder %s369, 7
        %s373 = scalar_select %p372, %s369, 7
        %s374 = smul.addr %s371, 8
        %s375 = sadd.s32 %s373, %s374
        %s376 = smul.addr %s375, 4
        %s377 = scalar_lea.vmem %s1, %s376
        // Predicated region
        $region29: #{tpu_custom_call.1} parent=23 // pred_check
          %p378 = pneg %p75
        $region30: #{tpu_custom_call.1} parent=23 // pred_check_branch
          %380 = sbr.rel (%p378) target = $region32
        $region31: #{tpu_custom_call.1} parent=23 // pred_region
          %s381 = smul.u32 8, %s20
        $region32: #{tpu_custom_call.1} parent=23 // pred_fallthru
          _
      $region24: #{tpu_custom_call.1} parent=5 // pred_fallthru
        _
      %p382 = scmp.le.s32.totalorder 2, %s10
      // Predicated region
      $region33: #{tpu_custom_call.1} parent=5 // pred_check
        %p383 = pneg %p382
      $region34: #{tpu_custom_call.1} parent=5 // pred_check_branch
        %385 = sbr.rel (%p383) target = $region36
      $region35: #{tpu_custom_call.1} parent=5 // pred_region
        %s386 = ssub.s32 %s10, 2
        // Predicated region
        $region37: #{tpu_custom_call.1} parent=35 // pred_check
          %p387 = pneg %p81
        $region38: #{tpu_custom_call.1} parent=35 // pred_check_branch
          %389 = sbr.rel (%p387) target = $region40
        $region39: #{tpu_custom_call.1} parent=35 // pred_region
          %s390 = smul.u32 8, %s22
          %p391 = scmp.lt.s32.totalorder %s21, 1
          %s392 = scalar_select %p391, %s21, 1
          %p393 = scmp.lt.s32.totalorder %s390, 7
          %s394 = scalar_select %p393, %s390, 7
          %s395 = smul.addr %s392, 8
          %s396 = sadd.s32 %s394, %s395
          %s397 = smul.addr %s396, 4
          %s398 = scalar_lea.vmem %s1, %s397
        $region40: #{tpu_custom_call.1} parent=35 // pred_fallthru
          _
      $region36: #{tpu_custom_call.1} parent=5 // pred_fallthru
        _
    $region6: #{tpu_custom_call.1} parent=1 // loop_footer
      %s14 = sadd.s32 1, %s10
    $region7: #{tpu_custom_call.1} parent=1 // loop_footer_branch
      %9 = sbr.rel target = $region3
    $region8: #{tpu_custom_call.1} parent=1 // loop_exit
      _
    %399 = vsyncpa [#allocation3], 1
    %s400 = scalar_lea.sflag [#allocation3], 1
    %401 = vsyncpa %s400, 1

</llo_original>
